<compile_context>
chip_gen: v5e
topology: v5e:2x2
jax: 0.10.0
libtpu: 0.0.40
codegen_flags: <defaults>
</compile_context>

<pallas_src>
import jax
import jax.numpy as jnp
from jax.experimental import pallas as pl
from jax.experimental.pallas import tpu as pltpu


def _pos_embed_kernel(col_ref, row_ref, out_ref):
    """Grid step p writes one channel half of the (2, F, H, W) position slab.

    col_ref: (W, F)   column (x) embeddings for i = 0..W-1
    row_ref: (H, F)   row    (y) embeddings for j = 0..H-1
    out_ref: (F, H, W) block (leading '2' axis squeezed);
             p == 0 -> out[f, j, i] = col[i, f]
             p == 1 -> out[f, j, i] = row[j, f]
    """
    F, H, W = out_ref.shape
    part = pl.program_id(0)

    @pl.when(part == 0)
    def _():
        col_t = col_ref[...].T                                  # (F, W), tiny XLU transpose
        # One dense whole-block store: replicate the x-embeds across all rows j.
        out_ref[...] = jnp.broadcast_to(
            col_t[:, None, :], (F, H, W)).astype(out_ref.dtype)

    @pl.when(part == 1)
    def _():
        row_t = row_ref[...].T                                  # (F, H)
        # One dense whole-block store: replicate the y-embeds across all cols i.
        out_ref[...] = jnp.broadcast_to(
            row_t[:, :, None], (F, H, W)).astype(out_ref.dtype)


def position_embedding_learned(x, row_embed_weight, col_embed_weight,
                               out_dtype=None):
    """Forward pass of PositionEmbeddingLearned.

    x:                 (B, C, H, W)  (only shape used, like PyTorch)
    row_embed_weight:  (50, F)
    col_embed_weight:  (50, F)
    out_dtype:         optional output dtype (e.g. jnp.bfloat16); defaults to
                       the embedding-weight dtype.
    returns:           (B, 2F, H, W)
    """
    B, _, H, W = x.shape
    F = row_embed_weight.shape[1]
    dtype = out_dtype if out_dtype is not None else row_embed_weight.dtype

    # PyTorch's nn.Embedding would raise on out-of-range indices; be explicit.
    assert H <= row_embed_weight.shape[0], "H exceeds row_embed table size"
    assert W <= col_embed_weight.shape[0], "W exceeds col_embed table size"

    # Embedding lookup with arange indices == slicing the first W/H rows (glue).
    col_w = col_embed_weight[:W]   # (W, F)
    row_w = row_embed_weight[:H]   # (H, F)

    pos2 = pl.pallas_call(
        _pos_embed_kernel,
        out_shape=jax.ShapeDtypeStruct((2, F, H, W), dtype),
        grid_spec=pltpu.PrefetchScalarGridSpec(
            num_scalar_prefetch=0,
            grid=(2,),  # one step per channel half; both TCs on v7x
            in_specs=[
                pl.BlockSpec((W, F), lambda p: (0, 0)),
                pl.BlockSpec((H, F), lambda p: (0, 0)),
            ],
            out_specs=pl.BlockSpec((pl.Squeezed(), F, H, W),
                                   lambda p: (p, 0, 0, 0)),
        ),
        compiler_params=pltpu.CompilerParams(
            dimension_semantics=("parallel",)),
    )(col_w, row_w)

    # Layout plumbing only: merge the contiguous leading (2, F) dims (free),
    # then broadcast over batch (all batch elements identical by construction).
    pos = pos2.reshape(2 * F, H, W)
    return jnp.broadcast_to(pos[None], (B, 2 * F, H, W))


if __name__ == "__main__":
    key = jax.random.PRNGKey(0)
    k_row, k_col, k_x = jax.random.split(key, 3)

    num_pos_feats = 32          # small F for the test (module default is 256)
    B, C, H, W = 2, 4, 16, 16

    # nn.init.uniform_ -> U[0, 1)
    row_embed_weight = jax.random.uniform(k_row, (50, num_pos_feats), jnp.float32)
    col_embed_weight = jax.random.uniform(k_col, (50, num_pos_feats), jnp.float32)

    x = jax.random.normal(k_x, (B, C, H, W), jnp.float32)

    pos = position_embedding_learned(x, row_embed_weight, col_embed_weight)
    pos = jax.block_until_ready(pos)

    # Reference in plain JAX (same math as the PyTorch forward).
    x_emb = col_embed_weight[:W]                       # (W, F)
    y_emb = row_embed_weight[:H]                       # (H, F)
    ref_hwc = jnp.concatenate(
        [jnp.broadcast_to(x_emb[None, :, :], (H, W, num_pos_feats)),
         jnp.broadcast_to(y_emb[:, None, :], (H, W, num_pos_feats))], axis=-1)
    ref = jnp.broadcast_to(
        jnp.transpose(ref_hwc, (2, 0, 1))[None], (B, 2 * num_pos_feats, H, W))

    assert pos.shape == (B, 2 * num_pos_feats, H, W)
    assert pos.dtype == jnp.float32
    assert jnp.allclose(pos, ref), "mismatch vs reference"
    print("KERNEL_OK")
</pallas_src>

<mosaic_0001>
module attributes {stable_mosaic.version = 11 : i64} {
  func.func @_pos_embed_kernel(%arg0: i32, %arg1: memref<16x32xf32, #tpu.memory_space<vmem>>, %arg2: memref<16x32xf32, #tpu.memory_space<vmem>>, %arg3: memref<1x32x16x16xf32, #tpu.memory_space<vmem>>) attributes {dimension_semantics = [#tpu.dimension_semantics<parallel>], iteration_bounds = array<i64: 2>, scalar_prefetch = 0 : i64, scratch_operands = 0 : i64, tpu.core_type = #tpu.core_type<tc>, window_params = [{pipeline_mode = #tpu.pipeline_mode<synchronous>, transform_indices = @transform_0, window_bounds = array<i64: 16, 32>}, {pipeline_mode = #tpu.pipeline_mode<synchronous>, transform_indices = @transform_1, window_bounds = array<i64: 16, 32>}, {transform_indices = @transform_2, window_bounds = array<i64: 1, 32, 16, 16>}]} {
    %c0_i32 = arith.constant 0 : i32
    %0 = arith.cmpi eq, %arg0, %c0_i32 : i32
    %1 = arith.extui %0 : i1 to i32
    %c0_i32_0 = arith.constant 0 : i32
    %2 = arith.cmpi ne, %1, %c0_i32_0 : i32
    scf.if %2 {
      %c0 = arith.constant 0 : index
      %c0_2 = arith.constant 0 : index
      %6 = vector.load %arg1[%c0, %c0_2] : memref<16x32xf32, #tpu.memory_space<vmem>>, vector<16x32xf32>
      %7 = tpu.transpose %6, [1, 0] : vector<16x32xf32> -> vector<32x16xf32>
      %8 = vector.shape_cast %7 : vector<32x16xf32> to vector<32x1x16xf32>
      %9 = vector.shape_cast %8 : vector<32x1x16xf32> to vector<32x1x16xf32>
      %10 = vector.broadcast %9 : vector<32x1x16xf32> to vector<32x16x16xf32>
      %c0_3 = arith.constant 0 : index
      %c0_4 = arith.constant 0 : index
      %c0_5 = arith.constant 0 : index
      %c0_6 = arith.constant 0 : index
      %11 = vector.load %arg3[%c0_3, %c0_4, %c0_5, %c0_6] : memref<1x32x16x16xf32, #tpu.memory_space<vmem>>, vector<1x32x16x16xf32>
      %12 = vector.shape_cast %11 : vector<1x32x16x16xf32> to vector<32x16x16xf32>
      %13 = vector.shape_cast %10 : vector<32x16x16xf32> to vector<1x32x16x16xf32>
      tpu.vector_store %arg3[%c0_3, %c0_4, %c0_5, %c0_6], %13 {strides = array<i32>} : memref<1x32x16x16xf32, #tpu.memory_space<vmem>>, vector<1x32x16x16xf32>,
    } else {
    }
    %c1_i32 = arith.constant 1 : i32
    %3 = arith.cmpi eq, %arg0, %c1_i32 : i32
    %4 = arith.extui %3 : i1 to i32
    %c0_i32_1 = arith.constant 0 : i32
    %5 = arith.cmpi ne, %4, %c0_i32_1 : i32
    scf.if %5 {
      %c0 = arith.constant 0 : index
      %c0_2 = arith.constant 0 : index
      %6 = vector.load %arg2[%c0, %c0_2] : memref<16x32xf32, #tpu.memory_space<vmem>>, vector<16x32xf32>
      %7 = tpu.transpose %6, [1, 0] : vector<16x32xf32> -> vector<32x16xf32>
      %8 = vector.shape_cast %7 : vector<32x16xf32> to vector<32x16x1xf32>
      %9 = vector.shape_cast %8 : vector<32x16x1xf32> to vector<32x16x1xf32>
      %10 = vector.broadcast %9 : vector<32x16x1xf32> to vector<32x16x16xf32>
      %c0_3 = arith.constant 0 : index
      %c0_4 = arith.constant 0 : index
      %c0_5 = arith.constant 0 : index
      %c0_6 = arith.constant 0 : index
      %11 = vector.load %arg3[%c0_3, %c0_4, %c0_5, %c0_6] : memref<1x32x16x16xf32, #tpu.memory_space<vmem>>, vector<1x32x16x16xf32>
      %12 = vector.shape_cast %11 : vector<1x32x16x16xf32> to vector<32x16x16xf32>
      %13 = vector.shape_cast %10 : vector<32x16x16xf32> to vector<1x32x16x16xf32>
      tpu.vector_store %arg3[%c0_3, %c0_4, %c0_5, %c0_6], %13 {strides = array<i32>} : memref<1x32x16x16xf32, #tpu.memory_space<vmem>>, vector<1x32x16x16xf32>,
    } else {
    }
    return
  }
  func.func @transform_0(%arg0: i32) -> (i32, i32) {
    %c0_i32 = arith.constant 0 : i32
    %c0_i32_0 = arith.constant 0 : i32
    %c0_i32_1 = arith.constant 0 : i32
    return %c0_i32, %c0_i32_0 : i32, i32
  }
  func.func @transform_1(%arg0: i32) -> (i32, i32) {
    %c0_i32 = arith.constant 0 : i32
    %c0_i32_0 = arith.constant 0 : i32
    %c0_i32_1 = arith.constant 0 : i32
    return %c0_i32, %c0_i32_0 : i32, i32
  }
  func.func @transform_2(%arg0: i32) -> (i32, i32, i32, i32) {
    %c0_i32 = arith.constant 0 : i32
    %c0_i32_0 = arith.constant 0 : i32
    %c0_i32_1 = arith.constant 0 : i32
    %c0_i32_2 = arith.constant 0 : i32
    return %arg0, %c0_i32, %c0_i32_0, %c0_i32_1 : i32, i32, i32, i32
  }
}

</mosaic_0001>

<llo_original>
// kernel: tpu_custom_call.1
$region0: #{tpu_custom_call.1}
  #allocation0 [shape = 'u32[]', space=smem, size = 0x4, offset = 0x4, fixed_abs, tag = 'smem constant byte address 0x4 - core index']
  #allocation1 [shape = 'u32[72,128]{1,0:T(1,128)}', space=vmem, size = 0x9000, scoped, tag = 'internal scratch']
  %s0 = inlined_call_operand.hbm [shape: f32[16,32], index: 0, kind: input, shape index: {}]
  %s1 = inlined_call_operand.hbm [shape: f32[16,32], index: 1, kind: input, shape index: {}]
  %s2 = inlined_call_operand.vmem [shape: f32[2,32,16,16], index: 2, kind: output, shape index: {}]
  %s3 = sld [smem:[#allocation0]]
  $region57: #{tpu_custom_call.1} parent=0
    _
  %s5 = ssub.s32 1, %s3
  %s6 = scalar_select 0, %s5, %s3
  $region1: #{tpu_custom_call.1} parent=0
    #allocation2 [shape = 'u8[8192]{0}', space=vmem, size = 0x2000, scoped, tag = 'input window, operand 0, single buffered']
    #allocation3 [shape = 's32[2]{0}', space=sflag, size = 0x8, scoped, tag = 'scoped memory for tpu_custom_call.1']
    #allocation4 [shape = 'u8[8192]{0}', space=vmem, size = 0x2000, scoped, tag = 'input window, operand 1, single buffered']
    #allocation5 [shape = 's32[1]{0}', space=sflag, size = 0x4, scoped, tag = 'scoped memory for tpu_custom_call.1']
    %7 = vsyncpa [#allocation3], 0
    %8 = vsyncpa [#allocation5], 0
    loop: start=0, step=1, limit=4
    $region2: #{tpu_custom_call.1} parent=1 // loop_pre_header
      _
    $region3: #{tpu_custom_call.1} parent=1 // loop_header
      %s10 = sphi 0, %s14
      %p11 = scmp.ge.s32.totalorder %s10, 4
      %s18 = sphi 0, %s18
      %s20 = sphi 0, %s18
      %s21 = sphi 0, %s20
      %s35 = sphi 0, %s21
      %s39 = sphi 0, %s39
      %s41 = sphi 0, %s39
      %s42 = sphi 0, %s41
      %s56 = sphi 0, %s42
      %s62 = sphi 0, %s64
      %s65 = sphi 0, %s62
      %s66 = sphi 0, %s65
      %s82 = sphi 0, %s66
    $region4: #{tpu_custom_call.1} parent=1 // loop_header_branch
      %13 = sbr.rel (%p11) target = $region8
    $region5: #{tpu_custom_call.1} parent=1 // loop_body
      %s15 = ssub.s32 %s10, 1
      %s16 = ssub.s32 %s10, 2
      %s17 = sadd.s32 %s10, 1
      %s19 = sadd.s32 %s18, 1
      %p22 = scmp.eq.s32.totalorder %s10, 1
      %p23 = scmp.ne.s32.totalorder %s18, %s20
      %p24 = scmp.eq.s32.totalorder %s10, 0
      %p25 = por %p23, %p24
      %p26 = scmp.ne.s32.totalorder %s18, %s20
      %p27 = scmp.eq.s32.totalorder %s15, 1
      %p28 = por %p26, %p27
      %p29 = scmp.ne.s32.totalorder %s20, %s21
      %p30 = scmp.eq.s32.totalorder %s15, 0
      %p31 = por %p29, %p30
      %p32 = scmp.ne.s32.totalorder %s20, %s21
      %p33 = scmp.eq.s32.totalorder %s16, 1
      %p34 = por %p32, %p33
      %p36 = scmp.ne.s32.totalorder %s21, %s35
      %p37 = scmp.eq.s32.totalorder %s16, 0
      %p38 = por %p36, %p37
      %s40 = sadd.s32 %s39, 1
      %p43 = scmp.eq.s32.totalorder %s10, 1
      %p44 = scmp.ne.s32.totalorder %s39, %s41
      %p45 = scmp.eq.s32.totalorder %s10, 0
      %p46 = por %p44, %p45
      %p47 = scmp.ne.s32.totalorder %s39, %s41
      %p48 = scmp.eq.s32.totalorder %s15, 1
      %p49 = por %p47, %p48
      %p50 = scmp.ne.s32.totalorder %s41, %s42
      %p51 = scmp.eq.s32.totalorder %s15, 0
      %p52 = por %p50, %p51
      %p53 = scmp.ne.s32.totalorder %s41, %s42
      %p54 = scmp.eq.s32.totalorder %s16, 1
      %p55 = por %p53, %p54
      %p57 = scmp.ne.s32.totalorder %s42, %s56
      %p58 = scmp.eq.s32.totalorder %s16, 0
      %p59 = por %p57, %p58
      %s60 = ssub.s32 %s10, %s17
      %p61 = scmp.eq.s32.totalorder %s60, 0
      %s63 = sadd.s32 %s62, 1
      %s64 = scalar_select %p61, %s62, %s63
      %p67 = pneg %p61
      %p68 = scmp.eq.s32.totalorder %s10, 1
      %p69 = por %p67, %p68
      %p70 = scmp.ne.s32.totalorder %s62, %s65
      %p71 = scmp.eq.s32.totalorder %s10, 0
      %p72 = por %p70, %p71
      %p73 = scmp.ne.s32.totalorder %s62, %s65
      %p74 = scmp.eq.s32.totalorder %s15, 1
      %p75 = por %p73, %p74
      %p76 = scmp.ne.s32.totalorder %s65, %s66
      %p77 = scmp.eq.s32.totalorder %s15, 0
      %p78 = por %p76, %p77
      %p79 = scmp.ne.s32.totalorder %s65, %s66
      %p80 = scmp.eq.s32.totalorder %s16, 1
      %p81 = por %p79, %p80
      %p83 = scmp.ne.s32.totalorder %s66, %s82
      %p84 = scmp.eq.s32.totalorder %s16, 0
      %p85 = por %p83, %p84
      %p86 = scmp.le.s32.totalorder 1, %s10
      %p87 = scmp.lt.s32.totalorder %s10, 3
      %p88 = pnand %p86, %p87
      %p89 = pneg %p88
      // Predicated region
      $region9: #{tpu_custom_call.1} parent=5 // pred_check
        _
      $region10: #{tpu_custom_call.1} parent=5 // pred_check_branch
        %91 = sbr.rel (%p88) target = $region12
      $region11: #{tpu_custom_call.1} parent=5 // pred_region
        %s92 = ssub.s32 %s10, 1
        // Predicated region
        $region13: #{tpu_custom_call.1} parent=11 // pred_check
          %p93 = pneg %p31
        $region14: #{tpu_custom_call.1} parent=11 // pred_check_branch
          %95 = sbr.rel (%p93) target = $region16
        $region15: #{tpu_custom_call.1} parent=11 // pred_region
          %97 = vsyncadd [#allocation3], 0
          %s98 = sshll.u32 %s0, 4
          %s99 = int_to_ptr.hbm [resolvable:$true] %s98
          %s100 = sshll.u32 [#allocation2], 4
          %s101 = int_to_ptr.vmem [resolvable:$true] %s100
          %106 = dma.hbm_to_vmem [thread:$0]  %s99, 256, %s101, [#allocation3], 128, 128, 8
        $region16: #{tpu_custom_call.1} parent=11 // pred_fallthru
          _
        // Predicated region
        $region17: #{tpu_custom_call.1} parent=11 // pred_check
          %p107 = pneg %p52
        $region18: #{tpu_custom_call.1} parent=11 // pred_check_branch
          %109 = sbr.rel (%p107) target = $region20
        $region19: #{tpu_custom_call.1} parent=11 // pred_region
          %111 = vsyncadd [#allocation5], 0
          %s112 = sshll.u32 %s1, 4
          %s113 = int_to_ptr.hbm [resolvable:$true] %s112
          %s114 = sshll.u32 [#allocation4], 4
          %s115 = int_to_ptr.vmem [resolvable:$true] %s114
          %120 = dma.hbm_to_vmem [thread:$0]  %s113, 256, %s115, [#allocation5], 128, 128, 8
        $region20: #{tpu_custom_call.1} parent=11 // pred_fallthru
          _
      $region12: #{tpu_custom_call.1} parent=5 // pred_fallthru
        _
      %p121 = scmp.lt.s32.totalorder %s10, 2
      // Predicated region
      $region21: #{tpu_custom_call.1} parent=5 // pred_check
        %p122 = pneg %p121
      $region22: #{tpu_custom_call.1} parent=5 // pred_check_branch
        %124 = sbr.rel (%p122) target = $region24
      $region23: #{tpu_custom_call.1} parent=5 // pred_region
        _
      $region24: #{tpu_custom_call.1} parent=5 // pred_fallthru
        _
      %p125 = scmp.le.s32.totalorder 1, %s10
      %p126 = scmp.lt.s32.totalorder %s10, 3
      %p127 = pnand %p125, %p126
      %p128 = pneg %p127
      // Predicated region
      $region25: #{tpu_custom_call.1} parent=5 // pred_check
        _
      $region26: #{tpu_custom_call.1} parent=5 // pred_check_branch
        %130 = sbr.rel (%p127) target = $region28
      $region27: #{tpu_custom_call.1} parent=5 // pred_region
        %s131 = ssub.s32 %s10, 1
        // Predicated region
        $region29: #{tpu_custom_call.1} parent=27 // pred_check
          %p132 = pneg %p31
        $region30: #{tpu_custom_call.1} parent=27 // pred_check_branch
          %134 = sbr.rel (%p132) target = $region32
        $region31: #{tpu_custom_call.1} parent=27 // pred_region
          %136 = dma.done [#allocation3], 256
        $region32: #{tpu_custom_call.1} parent=27 // pred_fallthru
          _
        // Predicated region
        $region33: #{tpu_custom_call.1} parent=27 // pred_check
          %p137 = pneg %p52
        $region34: #{tpu_custom_call.1} parent=27 // pred_check_branch
          %139 = sbr.rel (%p137) target = $region36
        $region35: #{tpu_custom_call.1} parent=27 // pred_region
          %141 = dma.done [#allocation5], 256
        $region36: #{tpu_custom_call.1} parent=27 // pred_fallthru
          _
        %p142 = pneg %p31
        %p143 = pneg %p28
        %p144 = pneg %p52
        %p145 = pneg %p49
        %p146 = pneg %p78
        %p147 = pneg %p75
        %p148 = scmp.lt.s32.totalorder %s15, 1
        %s149 = scalar_select %p148, %s15, 1
        %s150 = smul.addr %s149, 64
        %s151 = smul.addr %s150, 8
        %s152 = scalar_lea.vmem %s2, %s151
        %p153 = scmp.lt.s32.totalorder %s15, 1
        %s154 = scalar_select %p153, %s15, 1
        %s155 = smul.addr %s154, 64
        %s156 = smul.addr %s155, 8
        %s157 = scalar_lea.vmem %s2, %s156
        %p158 = scmp.eq.s32.totalorder %s15, 0
        // Predicated region
        $region37: #{tpu_custom_call.1} parent=27 // pred_check
          %p159 = pneg %p158
        $region38: #{tpu_custom_call.1} parent=27 // pred_check_branch
          %161 = sbr.rel (%p159) target = $region40
        $region39: #{tpu_custom_call.1} parent=27 // pred_region
          %v162 = vld [vmem:[#allocation2] sm:$0xff]
          %v163 = vld [vmem:[#allocation2 + $0x8] sm:$0xff]
          %164 = vxpose.xlu0.b32.start [1/16] %v162, 128
          %165 = vxpose.xlu0.b32.cont [2/16] %v163, 128
          %166 = vxpose.xlu0.b32.cont [3/16] 0.0, 128
          %167 = vxpose.xlu0.b32.cont [4/16] 0.0, 128
          %168 = vxpose.xlu0.b32.cont [5/16] 0.0, 128
          %169 = vxpose.xlu0.b32.cont [6/16] 0.0, 128
          %170 = vxpose.xlu0.b32.cont [7/16] 0.0, 128
          %171 = vxpose.xlu0.b32.cont [8/16] 0.0, 128
          %172 = vxpose.xlu0.b32.cont [9/16] 0.0, 128
          %173 = vxpose.xlu0.b32.cont [10/16] 0.0, 128
          %174 = vxpose.xlu0.b32.cont [11/16] 0.0, 128
          %175 = vxpose.xlu0.b32.cont [12/16] 0.0, 128
          %176 = vxpose.xlu0.b32.cont [13/16] 0.0, 128
          %177 = vxpose.xlu0.b32.cont [14/16] 0.0, 128
          %178 = vxpose.xlu0.b32.cont [15/16] 0.0, 128
          %179 = vxpose.xlu0.b32.end [16/16] 0.0, 128
          %v180 = vpop.trf.xlu0
          %v181 = vpop.trf.xlu0
          %v182 = vpop.trf.xlu0
          %v183 = vpop.trf.xlu0
          %v184 = vpop.trf.xlu0
          %v185 = vpop.trf.xlu0
          %v186 = vpop.trf.xlu0
          %v187 = vpop.trf.xlu0
          %v188 = vpop.trf.xlu0
          %v189 = vpop.trf.xlu0
          %v190 = vpop.trf.xlu0
          %v191 = vpop.trf.xlu0
          %v192 = vpop.trf.xlu0
          %v193 = vpop.trf.xlu0
          %v194 = vpop.trf.xlu0
          %v195 = vpop.trf.xlu0
          %v200 = vrot.slane %v180, 1
          %v201 = vrot.slane %v180, 2
          %v202 = vrot.slane %v180, 3
          %v203 = vrot.slane %v180, 4
          %v204 = vrot.slane %v180, 5
          %v205 = vrot.slane %v180, 6
          %v206 = vrot.slane %v180, 7
          %v207 = vrot.slane %v181, 1
          %v208 = vrot.slane %v181, 2
          %v209 = vrot.slane %v181, 3
          %v210 = vrot.slane %v181, 4
          %v211 = vrot.slane %v181, 5
          %v212 = vrot.slane %v181, 6
          %v213 = vrot.slane %v181, 7
          %v214 = vrot.slane %v182, 1
          %v215 = vrot.slane %v182, 2
          %v216 = vrot.slane %v182, 3
          %v217 = vrot.slane %v182, 4
          %v218 = vrot.slane %v182, 5
          %v219 = vrot.slane %v182, 6
          %v220 = vrot.slane %v182, 7
          %v221 = vrot.slane %v183, 1
          %v222 = vrot.slane %v183, 2
          %v223 = vrot.slane %v183, 3
          %v224 = vrot.slane %v183, 4
          %v225 = vrot.slane %v183, 5
          %v226 = vrot.slane %v183, 6
          %v227 = vrot.slane %v183, 7
          %v228 = vperm.slane %v180, 0
          %v229 = vperm.slane %v200, 0
          %v230 = vperm.slane %v201, 0
          %v231 = vperm.slane %v202, 0
          %v232 = vperm.slane %v203, 0
          %v233 = vperm.slane %v204, 0
          %v234 = vperm.slane %v205, 0
          %v235 = vperm.slane %v206, 0
          %v236 = vperm.slane %v181, 0
          %v237 = vperm.slane %v207, 0
          %v238 = vperm.slane %v208, 0
          %v239 = vperm.slane %v209, 0
          %v240 = vperm.slane %v210, 0
          %v241 = vperm.slane %v211, 0
          %v242 = vperm.slane %v212, 0
          %v243 = vperm.slane %v213, 0
          %v244 = vperm.slane %v182, 0
          %v245 = vperm.slane %v214, 0
          %v246 = vperm.slane %v215, 0
          %v247 = vperm.slane %v216, 0
          %v248 = vperm.slane %v217, 0
          %v249 = vperm.slane %v218, 0
          %v250 = vperm.slane %v219, 0
          %v251 = vperm.slane %v220, 0
          %v252 = vperm.slane %v183, 0
          %v253 = vperm.slane %v221, 0
          %v254 = vperm.slane %v222, 0
          %v255 = vperm.slane %v223, 0
          %v256 = vperm.slane %v224, 0
          %v257 = vperm.slane %v225, 0
          %v258 = vperm.slane %v226, 0
          %v259 = vperm.slane %v227, 0
          %vm292 = vcmask 130048
          %293 = vst.msk [vmem:[%s157] sm:$0xff] %vm292, %v228
          %294 = vst.msk [vmem:[%s157 + $0x8] sm:$0xff] %vm292, %v228
          %295 = vst.msk [vmem:[%s157 + $0x10] sm:$0xff] %vm292, %v229
          %296 = vst.msk [vmem:[%s157 + $0x18] sm:$0xff] %vm292, %v229
          %297 = vst.msk [vmem:[%s157 + $0x20] sm:$0xff] %vm292, %v230
          %298 = vst.msk [vmem:[%s157 + $0x28] sm:$0xff] %vm292, %v230
          %299 = vst.msk [vmem:[%s157 + $0x30] sm:$0xff] %vm292, %v231
          %300 = vst.msk [vmem:[%s157 + $0x38] sm:$0xff] %vm292, %v231
          %301 = vst.msk [vmem:[%s157 + $0x40] sm:$0xff] %vm292, %v232
          %302 = vst.msk [vmem:[%s157 + $0x48] sm:$0xff] %vm292, %v232
          %303 = vst.msk [vmem:[%s157 + $0x50] sm:$0xff] %vm292, %v233
          %304 = vst.msk [vmem:[%s157 + $0x58] sm:$0xff] %vm292, %v233
          %305 = vst.msk [vmem:[%s157 + $0x60] sm:$0xff] %vm292, %v234
          %306 = vst.msk [vmem:[%s157 + $0x68] sm:$0xff] %vm292, %v234
          %307 = vst.msk [vmem:[%s157 + $0x70] sm:$0xff] %vm292, %v235
          %308 = vst.msk [vmem:[%s157 + $0x78] sm:$0xff] %vm292, %v235
          %309 = vst.msk [vmem:[%s157 + $0x80] sm:$0xff] %vm292, %v236
          %310 = vst.msk [vmem:[%s157 + $0x88] sm:$0xff] %vm292, %v236
          %311 = vst.msk [vmem:[%s157 + $0x90] sm:$0xff] %vm292, %v237
          %312 = vst.msk [vmem:[%s157 + $0x98] sm:$0xff] %vm292, %v237
          %313 = vst.msk [vmem:[%s157 + $0xa0] sm:$0xff] %vm292, %v238
          %314 = vst.msk [vmem:[%s157 + $0xa8] sm:$0xff] %vm292, %v238
          %315 = vst.msk [vmem:[%s157 + $0xb0] sm:$0xff] %vm292, %v239
          %316 = vst.msk [vmem:[%s157 + $0xb8] sm:$0xff] %vm292, %v239
          %317 = vst.msk [vmem:[%s157 + $0xc0] sm:$0xff] %vm292, %v240
          %318 = vst.msk [vmem:[%s157 + $0xc8] sm:$0xff] %vm292, %v240
          %319 = vst.msk [vmem:[%s157 + $0xd0] sm:$0xff] %vm292, %v241
          %320 = vst.msk [vmem:[%s157 + $0xd8] sm:$0xff] %vm292, %v241
          %321 = vst.msk [vmem:[%s157 + $0xe0] sm:$0xff] %vm292, %v242
          %322 = vst.msk [vmem:[%s157 + $0xe8] sm:$0xff] %vm292, %v242
          %323 = vst.msk [vmem:[%s157 + $0xf0] sm:$0xff] %vm292, %v243
          %324 = vst.msk [vmem:[%s157 + $0xf8] sm:$0xff] %vm292, %v243
          %325 = vst.msk [vmem:[%s157 + $0x100] sm:$0xff] %vm292, %v244
          %326 = vst.msk [vmem:[%s157 + $0x108] sm:$0xff] %vm292, %v244
          %327 = vst.msk [vmem:[%s157 + $0x110] sm:$0xff] %vm292, %v245
          %328 = vst.msk [vmem:[%s157 + $0x118] sm:$0xff] %vm292, %v245
          %329 = vst.msk [vmem:[%s157 + $0x120] sm:$0xff] %vm292, %v246
          %330 = vst.msk [vmem:[%s157 + $0x128] sm:$0xff] %vm292, %v246
          %331 = vst.msk [vmem:[%s157 + $0x130] sm:$0xff] %vm292, %v247
          %332 = vst.msk [vmem:[%s157 + $0x138] sm:$0xff] %vm292, %v247
          %333 = vst.msk [vmem:[%s157 + $0x140] sm:$0xff] %vm292, %v248
          %334 = vst.msk [vmem:[%s157 + $0x148] sm:$0xff] %vm292, %v248
          %335 = vst.msk [vmem:[%s157 + $0x150] sm:$0xff] %vm292, %v249
          %336 = vst.msk [vmem:[%s157 + $0x158] sm:$0xff] %vm292, %v249
          %337 = vst.msk [vmem:[%s157 + $0x160] sm:$0xff] %vm292, %v250
          %338 = vst.msk [vmem:[%s157 + $0x168] sm:$0xff] %vm292, %v250
          %339 = vst.msk [vmem:[%s157 + $0x170] sm:$0xff] %vm292, %v251
          %340 = vst.msk [vmem:[%s157 + $0x178] sm:$0xff] %vm292, %v251
          %341 = vst.msk [vmem:[%s157 + $0x180] sm:$0xff] %vm292, %v252
          %342 = vst.msk [vmem:[%s157 + $0x188] sm:$0xff] %vm292, %v252
          %343 = vst.msk [vmem:[%s157 + $0x190] sm:$0xff] %vm292, %v253
          %344 = vst.msk [vmem:[%s157 + $0x198] sm:$0xff] %vm292, %v253
          %345 = vst.msk [vmem:[%s157 + $0x1a0] sm:$0xff] %vm292, %v254
          %346 = vst.msk [vmem:[%s157 + $0x1a8] sm:$0xff] %vm292, %v254
          %347 = vst.msk [vmem:[%s157 + $0x1b0] sm:$0xff] %vm292, %v255
          %348 = vst.msk [vmem:[%s157 + $0x1b8] sm:$0xff] %vm292, %v255
          %349 = vst.msk [vmem:[%s157 + $0x1c0] sm:$0xff] %vm292, %v256
          %350 = vst.msk [vmem:[%s157 + $0x1c8] sm:$0xff] %vm292, %v256
          %351 = vst.msk [vmem:[%s157 + $0x1d0] sm:$0xff] %vm292, %v257
          %352 = vst.msk [vmem:[%s157 + $0x1d8] sm:$0xff] %vm292, %v257
          %353 = vst.msk [vmem:[%s157 + $0x1e0] sm:$0xff] %vm292, %v258
          %354 = vst.msk [vmem:[%s157 + $0x1e8] sm:$0xff] %vm292, %v258
          %355 = vst.msk [vmem:[%s157 + $0x1f0] sm:$0xff] %vm292, %v259
          %356 = vst.msk [vmem:[%s157 + $0x1f8] sm:$0xff] %vm292, %v259
        $region40: #{tpu_custom_call.1} parent=27 // pred_fallthru
          _
        %p357 = scmp.eq.s32.totalorder %s15, 1
        // Predicated region
        $region41: #{tpu_custom_call.1} parent=27 // pred_check
          %p358 = pneg %p357
        $region42: #{tpu_custom_call.1} parent=27 // pred_check_branch
          %360 = sbr.rel (%p358) target = $region44
        $region43: #{tpu_custom_call.1} parent=27 // pred_region
          %v361 = vld [vmem:[#allocation4] sm:$0xff]
          %v362 = vld [vmem:[#allocation4 + $0x8] sm:$0xff]
          %363 = vxpose.xlu0.b32.start [1/16] %v361, 128
          %364 = vxpose.xlu0.b32.cont [2/16] %v362, 128
          %365 = vxpose.xlu0.b32.cont [3/16] 0.0, 128
          %366 = vxpose.xlu0.b32.cont [4/16] 0.0, 128
          %367 = vxpose.xlu0.b32.cont [5/16] 0.0, 128
          %368 = vxpose.xlu0.b32.cont [6/16] 0.0, 128
          %369 = vxpose.xlu0.b32.cont [7/16] 0.0, 128
          %370 = vxpose.xlu0.b32.cont [8/16] 0.0, 128
          %371 = vxpose.xlu0.b32.cont [9/16] 0.0, 128
          %372 = vxpose.xlu0.b32.cont [10/16] 0.0, 128
          %373 = vxpose.xlu0.b32.cont [11/16] 0.0, 128
          %374 = vxpose.xlu0.b32.cont [12/16] 0.0, 128
          %375 = vxpose.xlu0.b32.cont [13/16] 0.0, 128
          %376 = vxpose.xlu0.b32.cont [14/16] 0.0, 128
          %377 = vxpose.xlu0.b32.cont [15/16] 0.0, 128
          %378 = vxpose.xlu0.b32.end [16/16] 0.0, 128
          %v379 = vpop.trf.xlu0
          %v380 = vpop.trf.xlu0
          %v381 = vpop.trf.xlu0
          %v382 = vpop.trf.xlu0
          %v383 = vpop.trf.xlu0
          %v384 = vpop.trf.xlu0
          %v385 = vpop.trf.xlu0
          %v386 = vpop.trf.xlu0
          %v387 = vpop.trf.xlu0
          %v388 = vpop.trf.xlu0
          %v389 = vpop.trf.xlu0
          %v390 = vpop.trf.xlu0
          %v391 = vpop.trf.xlu0
          %v392 = vpop.trf.xlu0
          %v393 = vpop.trf.xlu0
          %v394 = vpop.trf.xlu0
          %v395 = vperm.slane %v379, 0
          %v396 = vlaneseq
          %v397 = vshrl.u32 %v396, 7
          %399 = vset.pattern.permute.xlu0 %v397
          %400 = vperm.xlu0 %399, %v395
          %v401 = vpop.permute.xlu0 %400
          %v402 = vlaneseq
          %v403 = vshrl.u32 %v402, 7
          %v404 = vadd.s32 %v403, 8
          %405 = vset.pattern.permute.xlu0 %v404
          %406 = vperm.xlu0 %405, %v395
          %v407 = vpop.permute.xlu0 %406
          %v408 = vperm.slane %v379, 1
          %v409 = vlaneseq
          %v410 = vshrl.u32 %v409, 7
          %412 = vset.pattern.permute.xlu0 %v410
          %413 = vperm.xlu0 %412, %v408
          %v414 = vpop.permute.xlu0 %413
          %v415 = vlaneseq
          %v416 = vshrl.u32 %v415, 7
          %v417 = vadd.s32 %v416, 8
          %418 = vset.pattern.permute.xlu0 %v417
          %419 = vperm.xlu0 %418, %v408
          %v420 = vpop.permute.xlu0 %419
          %v421 = vperm.slane %v379, 2
          %v422 = vlaneseq
          %v423 = vshrl.u32 %v422, 7
          %425 = vset.pattern.permute.xlu0 %v423
          %426 = vperm.xlu0 %425, %v421
          %v427 = vpop.permute.xlu0 %426
          %v428 = vlaneseq
          %v429 = vshrl.u32 %v428, 7
          %v430 = vadd.s32 %v429, 8
          %431 = vset.pattern.permute.xlu0 %v430
          %432 = vperm.xlu0 %431, %v421
          %v433 = vpop.permute.xlu0 %432
          %v434 = vperm.slane %v379, 3
          %v435 = vlaneseq
          %v436 = vshrl.u32 %v435, 7
          %438 = vset.pattern.permute.xlu0 %v436
          %439 = vperm.xlu0 %438, %v434
          %v440 = vpop.permute.xlu0 %439
          %v441 = vlaneseq
          %v442 = vshrl.u32 %v441, 7
          %v443 = vadd.s32 %v442, 8
          %444 = vset.pattern.permute.xlu0 %v443
          %445 = vperm.xlu0 %444, %v434
          %v446 = vpop.permute.xlu0 %445
          %v447 = vperm.slane %v379, 4
          %v448 = vlaneseq
          %v449 = vshrl.u32 %v448, 7
          %451 = vset.pattern.permute.xlu0 %v449
          %452 = vperm.xlu0 %451, %v447
          %v453 = vpop.permute.xlu0 %452
          %v454 = vlaneseq
          %v455 = vshrl.u32 %v454, 7
          %v456 = vadd.s32 %v455, 8
          %457 = vset.pattern.permute.xlu0 %v456
          %458 = vperm.xlu0 %457, %v447
          %v459 = vpop.permute.xlu0 %458
          %v460 = vperm.slane %v379, 5
          %v461 = vlaneseq
          %v462 = vshrl.u32 %v461, 7
          %464 = vset.pattern.permute.xlu0 %v462
          %465 = vperm.xlu0 %464, %v460
          %v466 = vpop.permute.xlu0 %465
          %v467 = vlaneseq
          %v468 = vshrl.u32 %v467, 7
          %v469 = vadd.s32 %v468, 8
          %470 = vset.pattern.permute.xlu0 %v469
          %471 = vperm.xlu0 %470, %v460
          %v472 = vpop.permute.xlu0 %471
          %v473 = vperm.slane %v379, 6
          %v474 = vlaneseq
          %v475 = vshrl.u32 %v474, 7
          %477 = vset.pattern.permute.xlu0 %v475
          %478 = vperm.xlu0 %477, %v473
          %v479 = vpop.permute.xlu0 %478
          %v480 = vlaneseq
          %v481 = vshrl.u32 %v480, 7
          %v482 = vadd.s32 %v481, 8
          %483 = vset.pattern.permute.xlu0 %v482
          %484 = vperm.xlu0 %483, %v473
          %v485 = vpop.permute.xlu0 %484
          %v486 = vperm.slane %v379, 7
          %v487 = vlaneseq
          %v488 = vshrl.u32 %v487, 7
          %490 = vset.pattern.permute.xlu0 %v488
          %491 = vperm.xlu0 %490, %v486
          %v492 = vpop.permute.xlu0 %491
          %v493 = vlaneseq
          %v494 = vshrl.u32 %v493, 7
          %v495 = vadd.s32 %v494, 8
          %496 = vset.pattern.permute.xlu0 %v495
          %497 = vperm.xlu0 %496, %v486
          %v498 = vpop.permute.xlu0 %497
          %v499 = vperm.slane %v380, 0
          %v500 = vlaneseq
          %v501 = vshrl.u32 %v500, 7
          %503 = vset.pattern.permute.xlu0 %v501
          %504 = vperm.xlu0 %503, %v499
          %v505 = vpop.permute.xlu0 %504
          %v506 = vlaneseq
          %v507 = vshrl.u32 %v506, 7
          %v508 = vadd.s32 %v507, 8
          %509 = vset.pattern.permute.xlu0 %v508
          %510 = vperm.xlu0 %509, %v499
          %v511 = vpop.permute.xlu0 %510
          %v512 = vperm.slane %v380, 1
          %v513 = vlaneseq
          %v514 = vshrl.u32 %v513, 7
          %516 = vset.pattern.permute.xlu0 %v514
          %517 = vperm.xlu0 %516, %v512
          %v518 = vpop.permute.xlu0 %517
          %v519 = vlaneseq
          %v520 = vshrl.u32 %v519, 7
          %v521 = vadd.s32 %v520, 8
          %522 = vset.pattern.permute.xlu0 %v521
          %523 = vperm.xlu0 %522, %v512
          %v524 = vpop.permute.xlu0 %523
          %v525 = vperm.slane %v380, 2
          %v526 = vlaneseq
          %v527 = vshrl.u32 %v526, 7
          %529 = vset.pattern.permute.xlu0 %v527
          %530 = vperm.xlu0 %529, %v525
          %v531 = vpop.permute.xlu0 %530
          %v532 = vlaneseq
          %v533 = vshrl.u32 %v532, 7
          %v534 = vadd.s32 %v533, 8
          %535 = vset.pattern.permute.xlu0 %v534
          %536 = vperm.xlu0 %535, %v525
          %v537 = vpop.permute.xlu0 %536
          %v538 = vperm.slane %v380, 3
          %v539 = vlaneseq
          %v540 = vshrl.u32 %v539, 7
          %542 = vset.pattern.permute.xlu0 %v540
          %543 = vperm.xlu0 %542, %v538
          %v544 = vpop.permute.xlu0 %543
          %v545 = vlaneseq
          %v546 = vshrl.u32 %v545, 7
          %v547 = vadd.s32 %v546, 8
          %548 = vset.pattern.permute.xlu0 %v547
          %549 = vperm.xlu0 %548, %v538
          %v550 = vpop.permute.xlu0 %549
          %v551 = vperm.slane %v380, 4
          %v552 = vlaneseq
          %v553 = vshrl.u32 %v552, 7
          %555 = vset.pattern.permute.xlu0 %v553
          %556 = vperm.xlu0 %555, %v551
          %v557 = vpop.permute.xlu0 %556
          %v558 = vlaneseq
          %v559 = vshrl.u32 %v558, 7
          %v560 = vadd.s32 %v559, 8
          %561 = vset.pattern.permute.xlu0 %v560
          %562 = vperm.xlu0 %561, %v551
          %v563 = vpop.permute.xlu0 %562
          %v564 = vperm.slane %v380, 5
          %v565 = vlaneseq
          %v566 = vshrl.u32 %v565, 7
          %568 = vset.pattern.permute.xlu0 %v566
          %569 = vperm.xlu0 %568, %v564
          %v570 = vpop.permute.xlu0 %569
          %v571 = vlaneseq
          %v572 = vshrl.u32 %v571, 7
          %v573 = vadd.s32 %v572, 8
          %574 = vset.pattern.permute.xlu0 %v573
          %575 = vperm.xlu0 %574, %v564
          %v576 = vpop.permute.xlu0 %575
          %v577 = vperm.slane %v380, 6
          %v578 = vlaneseq
          %v579 = vshrl.u32 %v578, 7
          %581 = vset.pattern.permute.xlu0 %v579
          %582 = vperm.xlu0 %581, %v577
          %v583 = vpop.permute.xlu0 %582
          %v584 = vlaneseq
          %v585 = vshrl.u32 %v584, 7
          %v586 = vadd.s32 %v585, 8
          %587 = vset.pattern.permute.xlu0 %v586
          %588 = vperm.xlu0 %587, %v577
          %v589 = vpop.permute.xlu0 %588
          %v590 = vperm.slane %v380, 7
          %v591 = vlaneseq
          %v592 = vshrl.u32 %v591, 7
          %594 = vset.pattern.permute.xlu0 %v592
          %595 = vperm.xlu0 %594, %v590
          %v596 = vpop.permute.xlu0 %595
          %v597 = vlaneseq
          %v598 = vshrl.u32 %v597, 7
          %v599 = vadd.s32 %v598, 8
          %600 = vset.pattern.permute.xlu0 %v599
          %601 = vperm.xlu0 %600, %v590
          %v602 = vpop.permute.xlu0 %601
          %v603 = vperm.slane %v381, 0
          %v604 = vlaneseq
          %v605 = vshrl.u32 %v604, 7
          %607 = vset.pattern.permute.xlu0 %v605
          %608 = vperm.xlu0 %607, %v603
          %v609 = vpop.permute.xlu0 %608
          %v610 = vlaneseq
          %v611 = vshrl.u32 %v610, 7
          %v612 = vadd.s32 %v611, 8
          %613 = vset.pattern.permute.xlu0 %v612
          %614 = vperm.xlu0 %613, %v603
          %v615 = vpop.permute.xlu0 %614
          %v616 = vperm.slane %v381, 1
          %v617 = vlaneseq
          %v618 = vshrl.u32 %v617, 7
          %620 = vset.pattern.permute.xlu0 %v618
          %621 = vperm.xlu0 %620, %v616
          %v622 = vpop.permute.xlu0 %621
          %v623 = vlaneseq
          %v624 = vshrl.u32 %v623, 7
          %v625 = vadd.s32 %v624, 8
          %626 = vset.pattern.permute.xlu0 %v625
          %627 = vperm.xlu0 %626, %v616
          %v628 = vpop.permute.xlu0 %627
          %v629 = vperm.slane %v381, 2
          %v630 = vlaneseq
          %v631 = vshrl.u32 %v630, 7
          %633 = vset.pattern.permute.xlu0 %v631
          %634 = vperm.xlu0 %633, %v629
          %v635 = vpop.permute.xlu0 %634
          %v636 = vlaneseq
          %v637 = vshrl.u32 %v636, 7
          %v638 = vadd.s32 %v637, 8
          %639 = vset.pattern.permute.xlu0 %v638
          %640 = vperm.xlu0 %639, %v629
          %v641 = vpop.permute.xlu0 %640
          %v642 = vperm.slane %v381, 3
          %v643 = vlaneseq
          %v644 = vshrl.u32 %v643, 7
          %646 = vset.pattern.permute.xlu0 %v644
          %647 = vperm.xlu0 %646, %v642
          %v648 = vpop.permute.xlu0 %647
          %v649 = vlaneseq
          %v650 = vshrl.u32 %v649, 7
          %v651 = vadd.s32 %v650, 8
          %652 = vset.pattern.permute.xlu0 %v651
          %653 = vperm.xlu0 %652, %v642
          %v654 = vpop.permute.xlu0 %653
          %v655 = vperm.slane %v381, 4
          %v656 = vlaneseq
          %v657 = vshrl.u32 %v656, 7
          %659 = vset.pattern.permute.xlu0 %v657
          %660 = vperm.xlu0 %659, %v655
          %v661 = vpop.permute.xlu0 %660
          %v662 = vlaneseq
          %v663 = vshrl.u32 %v662, 7
          %v664 = vadd.s32 %v663, 8
          %665 = vset.pattern.permute.xlu0 %v664
          %666 = vperm.xlu0 %665, %v655
          %v667 = vpop.permute.xlu0 %666
          %v668 = vperm.slane %v381, 5
          %v669 = vlaneseq
          %v670 = vshrl.u32 %v669, 7
          %672 = vset.pattern.permute.xlu0 %v670
          %673 = vperm.xlu0 %672, %v668
          %v674 = vpop.permute.xlu0 %673
          %v675 = vlaneseq
          %v676 = vshrl.u32 %v675, 7
          %v677 = vadd.s32 %v676, 8
          %678 = vset.pattern.permute.xlu0 %v677
          %679 = vperm.xlu0 %678, %v668
          %v680 = vpop.permute.xlu0 %679
          %v681 = vperm.slane %v381, 6
          %v682 = vlaneseq
          %v683 = vshrl.u32 %v682, 7
          %685 = vset.pattern.permute.xlu0 %v683
          %686 = vperm.xlu0 %685, %v681
          %v687 = vpop.permute.xlu0 %686
          %v688 = vlaneseq
          %v689 = vshrl.u32 %v688, 7
          %v690 = vadd.s32 %v689, 8
          %691 = vset.pattern.permute.xlu0 %v690
          %692 = vperm.xlu0 %691, %v681
          %v693 = vpop.permute.xlu0 %692
          %v694 = vperm.slane %v381, 7
          %v695 = vlaneseq
          %v696 = vshrl.u32 %v695, 7
          %698 = vset.pattern.permute.xlu0 %v696
          %699 = vperm.xlu0 %698, %v694
          %v700 = vpop.permute.xlu0 %699
          %v701 = vlaneseq
          %v702 = vshrl.u32 %v701, 7
          %v703 = vadd.s32 %v702, 8
          %704 = vset.pattern.permute.xlu0 %v703
          %705 = vperm.xlu0 %704, %v694
          %v706 = vpop.permute.xlu0 %705
          %v707 = vperm.slane %v382, 0
          %v708 = vlaneseq
          %v709 = vshrl.u32 %v708, 7
          %711 = vset.pattern.permute.xlu0 %v709
          %712 = vperm.xlu0 %711, %v707
          %v713 = vpop.permute.xlu0 %712
          %v714 = vlaneseq
          %v715 = vshrl.u32 %v714, 7
          %v716 = vadd.s32 %v715, 8
          %717 = vset.pattern.permute.xlu0 %v716
          %718 = vperm.xlu0 %717, %v707
          %v719 = vpop.permute.xlu0 %718
          %v720 = vperm.slane %v382, 1
          %v721 = vlaneseq
          %v722 = vshrl.u32 %v721, 7
          %724 = vset.pattern.permute.xlu0 %v722
          %725 = vperm.xlu0 %724, %v720
          %v726 = vpop.permute.xlu0 %725
          %v727 = vlaneseq
          %v728 = vshrl.u32 %v727, 7
          %v729 = vadd.s32 %v728, 8
          %730 = vset.pattern.permute.xlu0 %v729
          %731 = vperm.xlu0 %730, %v720
          %v732 = vpop.permute.xlu0 %731
          %v733 = vperm.slane %v382, 2
          %v734 = vlaneseq
          %v735 = vshrl.u32 %v734, 7
          %737 = vset.pattern.permute.xlu0 %v735
          %738 = vperm.xlu0 %737, %v733
          %v739 = vpop.permute.xlu0 %738
          %v740 = vlaneseq
          %v741 = vshrl.u32 %v740, 7
          %v742 = vadd.s32 %v741, 8
          %743 = vset.pattern.permute.xlu0 %v742
          %744 = vperm.xlu0 %743, %v733
          %v745 = vpop.permute.xlu0 %744
          %v746 = vperm.slane %v382, 3
          %v747 = vlaneseq
          %v748 = vshrl.u32 %v747, 7
          %750 = vset.pattern.permute.xlu0 %v748
          %751 = vperm.xlu0 %750, %v746
          %v752 = vpop.permute.xlu0 %751
          %v753 = vlaneseq
          %v754 = vshrl.u32 %v753, 7
          %v755 = vadd.s32 %v754, 8
          %756 = vset.pattern.permute.xlu0 %v755
          %757 = vperm.xlu0 %756, %v746
          %v758 = vpop.permute.xlu0 %757
          %v759 = vperm.slane %v382, 4
          %v760 = vlaneseq
          %v761 = vshrl.u32 %v760, 7
          %763 = vset.pattern.permute.xlu0 %v761
          %764 = vperm.xlu0 %763, %v759
          %v765 = vpop.permute.xlu0 %764
          %v766 = vlaneseq
          %v767 = vshrl.u32 %v766, 7
          %v768 = vadd.s32 %v767, 8
          %769 = vset.pattern.permute.xlu0 %v768
          %770 = vperm.xlu0 %769, %v759
          %v771 = vpop.permute.xlu0 %770
          %v772 = vperm.slane %v382, 5
          %v773 = vlaneseq
          %v774 = vshrl.u32 %v773, 7
          %776 = vset.pattern.permute.xlu0 %v774
          %777 = vperm.xlu0 %776, %v772
          %v778 = vpop.permute.xlu0 %777
          %v779 = vlaneseq
          %v780 = vshrl.u32 %v779, 7
          %v781 = vadd.s32 %v780, 8
          %782 = vset.pattern.permute.xlu0 %v781
          %783 = vperm.xlu0 %782, %v772
          %v784 = vpop.permute.xlu0 %783
          %v785 = vperm.slane %v382, 6
          %v786 = vlaneseq
          %v787 = vshrl.u32 %v786, 7
          %789 = vset.pattern.permute.xlu0 %v787
          %790 = vperm.xlu0 %789, %v785
          %v791 = vpop.permute.xlu0 %790
          %v792 = vlaneseq
          %v793 = vshrl.u32 %v792, 7
          %v794 = vadd.s32 %v793, 8
          %795 = vset.pattern.permute.xlu0 %v794
          %796 = vperm.xlu0 %795, %v785
          %v797 = vpop.permute.xlu0 %796
          %v798 = vperm.slane %v382, 7
          %v799 = vlaneseq
          %v800 = vshrl.u32 %v799, 7
          %802 = vset.pattern.permute.xlu0 %v800
          %803 = vperm.xlu0 %802, %v798
          %v804 = vpop.permute.xlu0 %803
          %v805 = vlaneseq
          %v806 = vshrl.u32 %v805, 7
          %v807 = vadd.s32 %v806, 8
          %808 = vset.pattern.permute.xlu0 %v807
          %809 = vperm.xlu0 %808, %v798
          %v810 = vpop.permute.xlu0 %809
          %vm811 = vcmask 130048
          %812 = vst.msk [vmem:[%s157] sm:$0xff] %vm811, %v401
          %813 = vst.msk [vmem:[%s157 + $0x8] sm:$0xff] %vm811, %v407
          %814 = vst.msk [vmem:[%s157 + $0x10] sm:$0xff] %vm811, %v414
          %815 = vst.msk [vmem:[%s157 + $0x18] sm:$0xff] %vm811, %v420
          %816 = vst.msk [vmem:[%s157 + $0x20] sm:$0xff] %vm811, %v427
          %817 = vst.msk [vmem:[%s157 + $0x28] sm:$0xff] %vm811, %v433
          %818 = vst.msk [vmem:[%s157 + $0x30] sm:$0xff] %vm811, %v440
          %819 = vst.msk [vmem:[%s157 + $0x38] sm:$0xff] %vm811, %v446
          %820 = vst.msk [vmem:[%s157 + $0x40] sm:$0xff] %vm811, %v453
          %821 = vst.msk [vmem:[%s157 + $0x48] sm:$0xff] %vm811, %v459
          %822 = vst.msk [vmem:[%s157 + $0x50] sm:$0xff] %vm811, %v466
          %823 = vst.msk [vmem:[%s157 + $0x58] sm:$0xff] %vm811, %v472
          %824 = vst.msk [vmem:[%s157 + $0x60] sm:$0xff] %vm811, %v479
          %825 = vst.msk [vmem:[%s157 + $0x68] sm:$0xff] %vm811, %v485
          %826 = vst.msk [vmem:[%s157 + $0x70] sm:$0xff] %vm811, %v492
          %827 = vst.msk [vmem:[%s157 + $0x78] sm:$0xff] %vm811, %v498
          %828 = vst.msk [vmem:[%s157 + $0x80] sm:$0xff] %vm811, %v505
          %829 = vst.msk [vmem:[%s157 + $0x88] sm:$0xff] %vm811, %v511
          %830 = vst.msk [vmem:[%s157 + $0x90] sm:$0xff] %vm811, %v518
          %831 = vst.msk [vmem:[%s157 + $0x98] sm:$0xff] %vm811, %v524
          %832 = vst.msk [vmem:[%s157 + $0xa0] sm:$0xff] %vm811, %v531
          %833 = vst.msk [vmem:[%s157 + $0xa8] sm:$0xff] %vm811, %v537
          %834 = vst.msk [vmem:[%s157 + $0xb0] sm:$0xff] %vm811, %v544
          %835 = vst.msk [vmem:[%s157 + $0xb8] sm:$0xff] %vm811, %v550
          %836 = vst.msk [vmem:[%s157 + $0xc0] sm:$0xff] %vm811, %v557
          %837 = vst.msk [vmem:[%s157 + $0xc8] sm:$0xff] %vm811, %v563
          %838 = vst.msk [vmem:[%s157 + $0xd0] sm:$0xff] %vm811, %v570
          %839 = vst.msk [vmem:[%s157 + $0xd8] sm:$0xff] %vm811, %v576
          %840 = vst.msk [vmem:[%s157 + $0xe0] sm:$0xff] %vm811, %v583
          %841 = vst.msk [vmem:[%s157 + $0xe8] sm:$0xff] %vm811, %v589
          %842 = vst.msk [vmem:[%s157 + $0xf0] sm:$0xff] %vm811, %v596
          %843 = vst.msk [vmem:[%s157 + $0xf8] sm:$0xff] %vm811, %v602
          %844 = vst.msk [vmem:[%s157 + $0x100] sm:$0xff] %vm811, %v609
          %845 = vst.msk [vmem:[%s157 + $0x108] sm:$0xff] %vm811, %v615
          %846 = vst.msk [vmem:[%s157 + $0x110] sm:$0xff] %vm811, %v622
          %847 = vst.msk [vmem:[%s157 + $0x118] sm:$0xff] %vm811, %v628
          %848 = vst.msk [vmem:[%s157 + $0x120] sm:$0xff] %vm811, %v635
          %849 = vst.msk [vmem:[%s157 + $0x128] sm:$0xff] %vm811, %v641
          %850 = vst.msk [vmem:[%s157 + $0x130] sm:$0xff] %vm811, %v648
          %851 = vst.msk [vmem:[%s157 + $0x138] sm:$0xff] %vm811, %v654
          %852 = vst.msk [vmem:[%s157 + $0x140] sm:$0xff] %vm811, %v661
          %853 = vst.msk [vmem:[%s157 + $0x148] sm:$0xff] %vm811, %v667
          %854 = vst.msk [vmem:[%s157 + $0x150] sm:$0xff] %vm811, %v674
          %855 = vst.msk [vmem:[%s157 + $0x158] sm:$0xff] %vm811, %v680
          %856 = vst.msk [vmem:[%s157 + $0x160] sm:$0xff] %vm811, %v687
          %857 = vst.msk [vmem:[%s157 + $0x168] sm:$0xff] %vm811, %v693
          %858 = vst.msk [vmem:[%s157 + $0x170] sm:$0xff] %vm811, %v700
          %859 = vst.msk [vmem:[%s157 + $0x178] sm:$0xff] %vm811, %v706
          %860 = vst.msk [vmem:[%s157 + $0x180] sm:$0xff] %vm811, %v713
          %861 = vst.msk [vmem:[%s157 + $0x188] sm:$0xff] %vm811, %v719
          %862 = vst.msk [vmem:[%s157 + $0x190] sm:$0xff] %vm811, %v726
          %863 = vst.msk [vmem:[%s157 + $0x198] sm:$0xff] %vm811, %v732
          %864 = vst.msk [vmem:[%s157 + $0x1a0] sm:$0xff] %vm811, %v739
          %865 = vst.msk [vmem:[%s157 + $0x1a8] sm:$0xff] %vm811, %v745
          %866 = vst.msk [vmem:[%s157 + $0x1b0] sm:$0xff] %vm811, %v752
          %867 = vst.msk [vmem:[%s157 + $0x1b8] sm:$0xff] %vm811, %v758
          %868 = vst.msk [vmem:[%s157 + $0x1c0] sm:$0xff] %vm811, %v765
          %869 = vst.msk [vmem:[%s157 + $0x1c8] sm:$0xff] %vm811, %v771
          %870 = vst.msk [vmem:[%s157 + $0x1d0] sm:$0xff] %vm811, %v778
          %871 = vst.msk [vmem:[%s157 + $0x1d8] sm:$0xff] %vm811, %v784
          %872 = vst.msk [vmem:[%s157 + $0x1e0] sm:$0xff] %vm811, %v791
          %873 = vst.msk [vmem:[%s157 + $0x1e8] sm:$0xff] %vm811, %v797
          %874 = vst.msk [vmem:[%s157 + $0x1f0] sm:$0xff] %vm811, %v804
          %875 = vst.msk [vmem:[%s157 + $0x1f8] sm:$0xff] %vm811, %v810
        $region44: #{tpu_custom_call.1} parent=27 // pred_fallthru
          _
        %p876 = scmp.lt.s32.totalorder %s15, 1
        %s877 = scalar_select %p876, %s15, 1
        %s878 = smul.addr %s877, 64
        %s879 = smul.addr %s878, 8
        %s880 = scalar_lea.vmem %s2, %s879
        // Predicated region
        $region45: #{tpu_custom_call.1} parent=27 // pred_check
          %p881 = pneg %p75
        $region46: #{tpu_custom_call.1} parent=27 // pred_check_branch
          %883 = sbr.rel (%p881) target = $region48
        $region47: #{tpu_custom_call.1} parent=27 // pred_region
          _
        $region48: #{tpu_custom_call.1} parent=27 // pred_fallthru
          _
      $region28: #{tpu_custom_call.1} parent=5 // pred_fallthru
        _
      %p884 = scmp.le.s32.totalorder 2, %s10
      // Predicated region
      $region49: #{tpu_custom_call.1} parent=5 // pred_check
        %p885 = pneg %p884
      $region50: #{tpu_custom_call.1} parent=5 // pred_check_branch
        %887 = sbr.rel (%p885) target = $region52
      $region51: #{tpu_custom_call.1} parent=5 // pred_region
        %s888 = ssub.s32 %s10, 2
        // Predicated region
        $region53: #{tpu_custom_call.1} parent=51 // pred_check
          %p889 = pneg %p81
        $region54: #{tpu_custom_call.1} parent=51 // pred_check_branch
          %891 = sbr.rel (%p889) target = $region56
        $region55: #{tpu_custom_call.1} parent=51 // pred_region
          %p892 = scmp.lt.s32.totalorder %s16, 1
          %s893 = scalar_select %p892, %s16, 1
          %s894 = smul.addr %s893, 64
          %s895 = smul.addr %s894, 8
          %s896 = scalar_lea.vmem %s2, %s895
        $region56: #{tpu_custom_call.1} parent=51 // pred_fallthru
          _
      $region52: #{tpu_custom_call.1} parent=5 // pred_fallthru
        _
    $region6: #{tpu_custom_call.1} parent=1 // loop_footer
      %s14 = sadd.s32 1, %s10
    $region7: #{tpu_custom_call.1} parent=1 // loop_footer_branch
      %9 = sbr.rel target = $region3
    $region8: #{tpu_custom_call.1} parent=1 // loop_exit
      _
    %897 = vsyncpa [#allocation3], 1
    %s898 = scalar_lea.sflag [#allocation3], 1
    %899 = vsyncpa %s898, 1
    %900 = vsyncpa [#allocation5], 1

</llo_original>
